<compile_context>
chip_gen: v6e
topology: v6e:2x2x1
jax: 0.10.0
libtpu: 0.0.40
codegen_flags: <defaults>
</compile_context>

<pallas_src>
import functools

import jax
import jax.numpy as jnp
from jax.experimental import pallas as pl
from jax.experimental.pallas import tpu as pltpu

EPS = 1e-5  # nn.LayerNorm default


def _make_kernel(S):
    """Build the fused kernel with the static seq/gat split point S."""

    def kernel(
        feat_ref,   # [S+G, TB] feature-major activation slab tile (batch on lanes)
        g_ref,      # [S+G, 1]  concat(seq_layernorm.weight, gat_layernorm.weight)
        b_ref,      # [S+G, 1]  concat(seq_layernorm.bias,   gat_layernorm.bias)
        wsT_ref,    # [O, S]    predict_n Linear weight, seq half, transposed
        wgT_ref,    # [O, G]    predict_n Linear weight, gat half, transposed
        bias_ref,   # [O, 1]    predict_n Linear bias (column)
        outT_ref,   # [O, TB]   transposed output tile (batch on lane axis)
    ):
        x = feat_ref[...].astype(jnp.float32)        # LN in f32 (v5e: no bf16 VPU/EUP)
        gamma = g_ref[...]
        beta = b_ref[...]

        def layernorm(v, g, b):
            # Two-pass (torch-equivalent) variance; features on the sublane axis.
            mu = jnp.mean(v, axis=0, keepdims=True)                 # [1, TB]
            var = jnp.mean((v - mu) * (v - mu), axis=0, keepdims=True)
            return (v - mu) * jax.lax.rsqrt(var + EPS) * g + b

        seq_n = layernorm(x[:S], gamma[:S], beta[:S])               # [S, TB]
        gat_n = layernorm(x[S:], gamma[S:], beta[S:])               # [G, TB]

        # TODO(synk): nn.Dropout is identity in eval mode; training-mode dropout
        # (p_dropout > 0) is not emitted.

        # Split matmul == concat + Linear, already in transposed / lane-dense
        # orientation: lhs contracts dim 1, rhs contracts dim 0 (native MXU).
        acc = jnp.dot(
            wsT_ref[...], seq_n.astype(wsT_ref.dtype),
            preferred_element_type=jnp.float32,
            precision=jax.lax.Precision.HIGHEST)
        acc = acc + jnp.dot(
            wgT_ref[...], gat_n.astype(wgT_ref.dtype),
            preferred_element_type=jnp.float32,
            precision=jax.lax.Precision.HIGHEST)
        acc = acc + bias_ref[...].astype(jnp.float32)
        outT_ref[...] = acc.astype(outT_ref.dtype)

    return kernel


def _vmem_budget_bytes():
    """Generation-aware VMEM budget (v5e/v6e: 128 MiB -> 64 MiB budget;
    v7x: 64 MiB -> 32 MiB budget)."""
    cap = None
    try:
        cap = getattr(pltpu.get_tpu_info(), "vmem_capacity_bytes", None)
    except Exception:
        cap = None
    if not cap:
        cap = 64 * 1024 * 1024  # conservative (v7x-sized) fallback
    return min(cap // 2, 64 * 1024 * 1024)


def _pick_batch_tile(B, S, G, O, out_itemsize, vmem_budget_bytes):
    """Largest lane-dense (multiple-of-128) batch tile that fits the budget."""
    F = S + G
    # Resident params, f32 upper bound, minor dims padded to 128 lanes, x2 slack.
    resident = 2 * 4 * (2 * F * 128 + O * max(F, 128) + O * 128)
    # Streamed bytes per batch column: double-buffered input + output blocks.
    # Feature-major [F, TB] / [O, TB] blocks are lane-dense -> no minor padding.
    per_col = 2 * (4 * F + out_itemsize * O)
    tb = (vmem_budget_bytes - resident) // per_col
    tb = (tb // 128) * 128
    tb = max(128, min(tb, 8192))
    # v7x megacore: for large batches guarantee >= 2 grid blocks so the
    # "parallel" axis can shard across both TensorCores.  Only applied when the
    # half-tile still amortizes the ~0.35 us per-step overhead (>= 1024 cols).
    half = (pl.cdiv(B, 2) // 128) * 128
    if half >= 1024:
        tb = min(tb, half)
    return tb


def pronetwork_head_forward(
    feat_fm,                       # [S+G, B] feature-major encoder-output slab
    params,
    *,
    out_dtype=jnp.float32,
    matmul_dtype=jnp.float32,      # MXU operand dtype (f32 accumulate)
    batch_tile=None,
):
    """Fused LayerNorm(seq) + LayerNorm(gat) + concat + Linear head.

    Returns the TRANSPOSED result [O, B] (batch on the lane axis) so the
    kernel's stores are unmasked and no output transpose is needed; consumers
    should read column b as the PyTorch module's output row b.
    """
    S = params["seq_gamma"].shape[0]
    G = params["gat_gamma"].shape[0]
    F, B = feat_fm.shape
    assert F == S + G, (F, S, G)
    O = params["w_seq"].shape[1]
    out_itemsize = jnp.dtype(out_dtype).itemsize

    budget = _vmem_budget_bytes()
    TB = batch_tile if batch_tile is not None else _pick_batch_tile(
        B, S, G, O, out_itemsize, budget)
    if B <= TB:
        TB = B                                    # single full-extent block
    else:
        TB = max(128, (TB // 128) * 128)          # lane-dense tiles
    grid = (pl.cdiv(B, TB),)

    # One-time PARAM layout prep (tiny: O*(S+G) elements); in a real pipeline
    # this is done once at model-load time, never per step.
    ws_t = params["w_seq"].T.astype(matmul_dtype)                    # [O, S]
    wg_t = params["w_gat"].T.astype(matmul_dtype)                    # [O, G]
    bias_col = params["bias"].reshape(O, 1).astype(jnp.float32)      # [O, 1]
    ln_gamma = jnp.concatenate(
        [params["seq_gamma"], params["gat_gamma"]]).reshape(F, 1).astype(jnp.float32)
    ln_beta = jnp.concatenate(
        [params["seq_beta"], params["gat_beta"]]).reshape(F, 1).astype(jnp.float32)

    cost = pl.CostEstimate(
        flops=2 * B * F * O + 10 * B * F,
        transcendentals=2 * B,
        bytes_accessed=4 * B * F + out_itemsize * B * O
        + jnp.dtype(matmul_dtype).itemsize * O * F + 4 * (2 * F + O),
    )

    kernel = _make_kernel(S)

    out_t = pl.pallas_call(
        kernel,
        out_shape=jax.ShapeDtypeStruct((O, B), out_dtype),
        grid_spec=pltpu.PrefetchScalarGridSpec(
            num_scalar_prefetch=0,
            grid=grid,
            in_specs=[
                # Streamed, lane-dense feature-major activations.
                pl.BlockSpec((F, TB), lambda i: (0, i)),
                # Resident params: constant index_map -> fetched once, never
                # re-DMA'd per grid step (<200 KB total, VMEM cost negligible).
                pl.BlockSpec((F, 1), lambda i: (0, 0)),
                pl.BlockSpec((F, 1), lambda i: (0, 0)),
                pl.BlockSpec((O, S), lambda i: (0, 0)),
                pl.BlockSpec((O, G), lambda i: (0, 0)),
                pl.BlockSpec((O, 1), lambda i: (0, 0)),
            ],
            out_specs=pl.BlockSpec((O, TB), lambda i: (0, i)),
        ),
        compiler_params=pltpu.CompilerParams(
            dimension_semantics=("parallel",),
            # Same budget the tile picker used.
            vmem_limit_bytes=budget,
        ),
        cost_estimate=cost,
    )(feat_fm, ln_gamma, ln_beta, ws_t, wg_t, bias_col)

    return out_t  # [O, B]


def init_params(key, seq_size, gat_size, pro_out_size):
    pro_input_size = seq_size + gat_size
    k_w, k_b = jax.random.split(key)
    # nn.Linear default init: U(-1/sqrt(fan_in), 1/sqrt(fan_in))
    bound = 1.0 / jnp.sqrt(pro_input_size)
    w_full = jax.random.uniform(
        k_w, (pro_input_size, pro_out_size), jnp.float32, -bound, bound)
    bias = jax.random.uniform(k_b, (pro_out_size,), jnp.float32, -bound, bound)
    return {
        # nn.LayerNorm default init: weight=1, bias=0 (randomized-scale test
        # would also pass; keep the module defaults).
        "seq_gamma": jnp.ones((seq_size,), jnp.float32),
        "seq_beta": jnp.zeros((seq_size,), jnp.float32),
        "gat_gamma": jnp.ones((gat_size,), jnp.float32),
        "gat_beta": jnp.zeros((gat_size,), jnp.float32),
        "w_seq": w_full[:seq_size],        # [S, O]
        "w_gat": w_full[seq_size:],        # [G, O]
        "bias": bias,                      # [O]
    }


def reference_forward(seq_feat, gat_feat, params):
    """Pure-JAX (f32, batch-major) reference of ProNetwork.forward (default branch)."""
    def ln(x, g, b):
        mu = jnp.mean(x, axis=-1, keepdims=True)
        var = jnp.mean((x - mu) ** 2, axis=-1, keepdims=True)
        return (x - mu) / jnp.sqrt(var + EPS) * g + b

    seq_n = ln(seq_feat, params["seq_gamma"], params["seq_beta"])
    gat_n = ln(gat_feat, params["gat_gamma"], params["gat_beta"])
    feat = jnp.concatenate([seq_n, gat_n], axis=1)
    w_full = jnp.concatenate([params["w_seq"], params["w_gat"]], axis=0)
    return feat @ w_full + params["bias"]        # [B, O]


if __name__ == "__main__":
    key = jax.random.PRNGKey(0)
    k_feat, k_par, k_feat2 = jax.random.split(key, 3)

    # TODO(synk): BERT / BiLSTM / ProGAT encoder definitions are not provided;
    # their (feature-major) output slab is synthesized deterministically here.
    B, SEQ, GAT, OUT = 8, 32, 32, 16
    F = SEQ + GAT
    params = init_params(k_par, SEQ, GAT, OUT)

    # Case 1: module-consistent toy shapes (single block, grid of 1).
    feat_fm = jax.random.normal(k_feat, (F, B), jnp.float32)     # producer output
    out_t = jax.block_until_ready(pronetwork_head_forward(feat_fm, params))
    ref = reference_forward(feat_fm[:SEQ].T, feat_fm[SEQ:].T, params)   # [B, O]
    assert out_t.shape == (OUT, B)
    assert jnp.allclose(out_t, ref.T, atol=5e-3, rtol=5e-3), float(
        jnp.max(jnp.abs(out_t - ref.T)))

    # Case 2: exercise the batch-tiled, pipelined, lane-dense path (grid of 4).
    B2 = 1024
    feat_fm2 = jax.random.normal(k_feat2, (F, B2), jnp.float32)
    out_t2 = jax.block_until_ready(
        pronetwork_head_forward(feat_fm2, params, batch_tile=256))
    ref2 = reference_forward(feat_fm2[:SEQ].T, feat_fm2[SEQ:].T, params)
    assert out_t2.shape == (OUT, B2)
    assert jnp.allclose(out_t2, ref2.T, atol=5e-3, rtol=5e-3), float(
        jnp.max(jnp.abs(out_t2 - ref2.T)))

    print("KERNEL_OK")
</pallas_src>

<mosaic_0001>
module attributes {stable_mosaic.version = 11 : i64} {
  func.func @kernel(%arg0: i32, %arg1: memref<64x8xf32, #tpu.memory_space<vmem>>, %arg2: memref<64x1xf32, #tpu.memory_space<vmem>>, %arg3: memref<64x1xf32, #tpu.memory_space<vmem>>, %arg4: memref<16x32xf32, #tpu.memory_space<vmem>>, %arg5: memref<16x32xf32, #tpu.memory_space<vmem>>, %arg6: memref<16x1xf32, #tpu.memory_space<vmem>>, %arg7: memref<16x8xf32, #tpu.memory_space<vmem>>) attributes {dimension_semantics = [#tpu.dimension_semantics<parallel>], iteration_bounds = array<i64: 1>, scalar_prefetch = 0 : i64, scratch_operands = 0 : i64, tpu.core_type = #tpu.core_type<tc>, window_params = [{transform_indices = @transform_0, window_bounds = array<i64: 64, 8>}, {pipeline_mode = #tpu.pipeline_mode<synchronous>, transform_indices = @transform_1, window_bounds = array<i64: 64, 1>}, {pipeline_mode = #tpu.pipeline_mode<synchronous>, transform_indices = @transform_2, window_bounds = array<i64: 64, 1>}, {pipeline_mode = #tpu.pipeline_mode<synchronous>, transform_indices = @transform_3, window_bounds = array<i64: 16, 32>}, {pipeline_mode = #tpu.pipeline_mode<synchronous>, transform_indices = @transform_4, window_bounds = array<i64: 16, 32>}, {pipeline_mode = #tpu.pipeline_mode<synchronous>, transform_indices = @transform_5, window_bounds = array<i64: 16, 1>}, {transform_indices = @transform_6, window_bounds = array<i64: 16, 8>}]} {
    %c0 = arith.constant 0 : index
    %c0_0 = arith.constant 0 : index
    %0 = vector.load %arg1[%c0, %c0_0] : memref<64x8xf32, #tpu.memory_space<vmem>>, vector<64x8xf32>
    %c0_1 = arith.constant 0 : index
    %c0_2 = arith.constant 0 : index
    %1 = vector.load %arg2[%c0_1, %c0_2] : memref<64x1xf32, #tpu.memory_space<vmem>>, vector<64x1xf32>
    %c0_3 = arith.constant 0 : index
    %c0_4 = arith.constant 0 : index
    %2 = vector.load %arg3[%c0_3, %c0_4] : memref<64x1xf32, #tpu.memory_space<vmem>>, vector<64x1xf32>
    %3 = vector.extract_strided_slice %0 {offsets = [0, 0], sizes = [32, 8], strides = [1, 1]} : vector<64x8xf32> to vector<32x8xf32>
    %4 = vector.extract_strided_slice %1 {offsets = [0, 0], sizes = [32, 1], strides = [1, 1]} : vector<64x1xf32> to vector<32x1xf32>
    %5 = vector.extract_strided_slice %2 {offsets = [0, 0], sizes = [32, 1], strides = [1, 1]} : vector<64x1xf32> to vector<32x1xf32>
    %cst = arith.constant dense<0.000000e+00> : vector<8xf32>
    %6 = vector.multi_reduction <add>, %3, %cst [0] : vector<32x8xf32> to vector<8xf32>
    %7 = vector.shape_cast %6 : vector<8xf32> to vector<1x8xf32>
    %cst_5 = arith.constant 3.200000e+01 : f32
    %8 = vector.broadcast %cst_5 : f32 to vector<1x8xf32>
    %9 = arith.divf %7, %8 : vector<1x8xf32>
    %10 = vector.broadcast %9 : vector<1x8xf32> to vector<32x8xf32>
    %11 = arith.subf %3, %10 : vector<32x8xf32>
    %12 = vector.broadcast %9 : vector<1x8xf32> to vector<32x8xf32>
    %13 = arith.subf %3, %12 : vector<32x8xf32>
    %14 = arith.mulf %11, %13 : vector<32x8xf32>
    %cst_6 = arith.constant dense<0.000000e+00> : vector<8xf32>
    %15 = vector.multi_reduction <add>, %14, %cst_6 [0] : vector<32x8xf32> to vector<8xf32>
    %16 = vector.shape_cast %15 : vector<8xf32> to vector<1x8xf32>
    %cst_7 = arith.constant 3.200000e+01 : f32
    %17 = vector.broadcast %cst_7 : f32 to vector<1x8xf32>
    %18 = arith.divf %16, %17 : vector<1x8xf32>
    %19 = vector.broadcast %9 : vector<1x8xf32> to vector<32x8xf32>
    %20 = arith.subf %3, %19 : vector<32x8xf32>
    %cst_8 = arith.constant 9.99999974E-6 : f32
    %21 = vector.broadcast %cst_8 : f32 to vector<1x8xf32>
    %22 = arith.addf %18, %21 : vector<1x8xf32>
    %23 = math.rsqrt %22 : vector<1x8xf32>
    %24 = vector.broadcast %23 : vector<1x8xf32> to vector<32x8xf32>
    %25 = arith.mulf %20, %24 : vector<32x8xf32>
    %26 = vector.broadcast %4 : vector<32x1xf32> to vector<32x8xf32>
    %27 = arith.mulf %25, %26 : vector<32x8xf32>
    %28 = vector.broadcast %5 : vector<32x1xf32> to vector<32x8xf32>
    %29 = arith.addf %27, %28 : vector<32x8xf32>
    %30 = vector.extract_strided_slice %0 {offsets = [32, 0], sizes = [32, 8], strides = [1, 1]} : vector<64x8xf32> to vector<32x8xf32>
    %31 = vector.extract_strided_slice %1 {offsets = [32, 0], sizes = [32, 1], strides = [1, 1]} : vector<64x1xf32> to vector<32x1xf32>
    %32 = vector.extract_strided_slice %2 {offsets = [32, 0], sizes = [32, 1], strides = [1, 1]} : vector<64x1xf32> to vector<32x1xf32>
    %cst_9 = arith.constant dense<0.000000e+00> : vector<8xf32>
    %33 = vector.multi_reduction <add>, %30, %cst_9 [0] : vector<32x8xf32> to vector<8xf32>
    %34 = vector.shape_cast %33 : vector<8xf32> to vector<1x8xf32>
    %cst_10 = arith.constant 3.200000e+01 : f32
    %35 = vector.broadcast %cst_10 : f32 to vector<1x8xf32>
    %36 = arith.divf %34, %35 : vector<1x8xf32>
    %37 = vector.broadcast %36 : vector<1x8xf32> to vector<32x8xf32>
    %38 = arith.subf %30, %37 : vector<32x8xf32>
    %39 = vector.broadcast %36 : vector<1x8xf32> to vector<32x8xf32>
    %40 = arith.subf %30, %39 : vector<32x8xf32>
    %41 = arith.mulf %38, %40 : vector<32x8xf32>
    %cst_11 = arith.constant dense<0.000000e+00> : vector<8xf32>
    %42 = vector.multi_reduction <add>, %41, %cst_11 [0] : vector<32x8xf32> to vector<8xf32>
    %43 = vector.shape_cast %42 : vector<8xf32> to vector<1x8xf32>
    %cst_12 = arith.constant 3.200000e+01 : f32
    %44 = vector.broadcast %cst_12 : f32 to vector<1x8xf32>
    %45 = arith.divf %43, %44 : vector<1x8xf32>
    %46 = vector.broadcast %36 : vector<1x8xf32> to vector<32x8xf32>
    %47 = arith.subf %30, %46 : vector<32x8xf32>
    %cst_13 = arith.constant 9.99999974E-6 : f32
    %48 = vector.broadcast %cst_13 : f32 to vector<1x8xf32>
    %49 = arith.addf %45, %48 : vector<1x8xf32>
    %50 = math.rsqrt %49 : vector<1x8xf32>
    %51 = vector.broadcast %50 : vector<1x8xf32> to vector<32x8xf32>
    %52 = arith.mulf %47, %51 : vector<32x8xf32>
    %53 = vector.broadcast %31 : vector<32x1xf32> to vector<32x8xf32>
    %54 = arith.mulf %52, %53 : vector<32x8xf32>
    %55 = vector.broadcast %32 : vector<32x1xf32> to vector<32x8xf32>
    %56 = arith.addf %54, %55 : vector<32x8xf32>
    %c0_14 = arith.constant 0 : index
    %c0_15 = arith.constant 0 : index
    %57 = vector.load %arg4[%c0_14, %c0_15] : memref<16x32xf32, #tpu.memory_space<vmem>>, vector<16x32xf32>
    %cst_16 = arith.constant dense<0.000000e+00> : vector<16x8xf32>
    %58 = tpu.matmul %57, %29, %cst_16 {dimension_numbers = #tpu.dot_dimension_numbers<[1], [0], [0], [1], [0, 0, 1, 1], [], []>, precision = #tpu.contract_precision<fp32>} : vector<16x32xf32>, vector<32x8xf32>, vector<16x8xf32> -> vector<16x8xf32>
    %c0_17 = arith.constant 0 : index
    %c0_18 = arith.constant 0 : index
    %59 = vector.load %arg5[%c0_17, %c0_18] : memref<16x32xf32, #tpu.memory_space<vmem>>, vector<16x32xf32>
    %cst_19 = arith.constant dense<0.000000e+00> : vector<16x8xf32>
    %60 = tpu.matmul %59, %56, %cst_19 {dimension_numbers = #tpu.dot_dimension_numbers<[1], [0], [0], [1], [0, 0, 1, 1], [], []>, precision = #tpu.contract_precision<fp32>} : vector<16x32xf32>, vector<32x8xf32>, vector<16x8xf32> -> vector<16x8xf32>
    %61 = arith.addf %58, %60 : vector<16x8xf32>
    %c0_20 = arith.constant 0 : index
    %c0_21 = arith.constant 0 : index
    %62 = vector.load %arg6[%c0_20, %c0_21] : memref<16x1xf32, #tpu.memory_space<vmem>>, vector<16x1xf32>
    %63 = vector.broadcast %62 : vector<16x1xf32> to vector<16x8xf32>
    %64 = arith.addf %61, %63 : vector<16x8xf32>
    %c0_22 = arith.constant 0 : index
    %c0_23 = arith.constant 0 : index
    %65 = vector.load %arg7[%c0_22, %c0_23] : memref<16x8xf32, #tpu.memory_space<vmem>>, vector<16x8xf32>
    tpu.vector_store %arg7[%c0_22, %c0_23], %64 {strides = array<i32>} : memref<16x8xf32, #tpu.memory_space<vmem>>, vector<16x8xf32>,
    return
  }
  func.func @transform_0(%arg0: i32) -> (i32, i32) {
    %c0_i32 = arith.constant 0 : i32
    %c0_i32_0 = arith.constant 0 : i32
    return %c0_i32, %arg0 : i32, i32
  }
  func.func @transform_1(%arg0: i32) -> (i32, i32) {
    %c0_i32 = arith.constant 0 : i32
    %c0_i32_0 = arith.constant 0 : i32
    %c0_i32_1 = arith.constant 0 : i32
    return %c0_i32, %c0_i32_0 : i32, i32
  }
  func.func @transform_2(%arg0: i32) -> (i32, i32) {
    %c0_i32 = arith.constant 0 : i32
    %c0_i32_0 = arith.constant 0 : i32
    %c0_i32_1 = arith.constant 0 : i32
    return %c0_i32, %c0_i32_0 : i32, i32
  }
  func.func @transform_3(%arg0: i32) -> (i32, i32) {
    %c0_i32 = arith.constant 0 : i32
    %c0_i32_0 = arith.constant 0 : i32
    %c0_i32_1 = arith.constant 0 : i32
    return %c0_i32, %c0_i32_0 : i32, i32
  }
  func.func @transform_4(%arg0: i32) -> (i32, i32) {
    %c0_i32 = arith.constant 0 : i32
    %c0_i32_0 = arith.constant 0 : i32
    %c0_i32_1 = arith.constant 0 : i32
    return %c0_i32, %c0_i32_0 : i32, i32
  }
  func.func @transform_5(%arg0: i32) -> (i32, i32) {
    %c0_i32 = arith.constant 0 : i32
    %c0_i32_0 = arith.constant 0 : i32
    %c0_i32_1 = arith.constant 0 : i32
    return %c0_i32, %c0_i32_0 : i32, i32
  }
  func.func @transform_6(%arg0: i32) -> (i32, i32) {
    %c0_i32 = arith.constant 0 : i32
    %c0_i32_0 = arith.constant 0 : i32
    return %c0_i32, %arg0 : i32, i32
  }
}

</mosaic_0001>

<llo_original>
// kernel: tpu_custom_call.1
$region0: #{tpu_custom_call.1}
  #allocation0 [shape = 'u32[]', space=smem, size = 0x4, offset = 0x4, fixed_abs, tag = 'smem constant byte address 0x4 - core index']
  #allocation1 [shape = 'u32[144,128]{1,0:T(1,128)}', space=vmem, size = 0x12000, scoped, tag = 'internal scratch']
  %s0 = inlined_call_operand.vmem [shape: f32[64,8], index: 0, kind: input, shape index: {}]
  %s1 = inlined_call_operand.vmem [shape: f32[64,1], index: 1, kind: input, shape index: {}]
  %s2 = inlined_call_operand.vmem [shape: f32[64,1], index: 2, kind: input, shape index: {}]
  %s3 = inlined_call_operand.vmem [shape: f32[16,32], index: 3, kind: input, shape index: {}]
  %s4 = inlined_call_operand.vmem [shape: f32[16,32], index: 4, kind: input, shape index: {}]
  %s5 = inlined_call_operand.vmem [shape: f32[16,1], index: 5, kind: input, shape index: {}]
  %s6 = inlined_call_operand.vmem [shape: f32[16,8], index: 6, kind: output, shape index: {}]
  %s7 = sld [smem:[#allocation0]]
  $region34: #{tpu_custom_call.1} parent=0
    _
  %s9 = ssub.s32 1, %s7
  %s10 = scalar_select 0, %s9, %s7
  // Predicated region
  $region2: #{tpu_custom_call.1} parent=0 // pred_check
    _
  $region3: #{tpu_custom_call.1} parent=0 // pred_check_branch
    %12 = sbr.rel (0) target = $region5
  $region4: #{tpu_custom_call.1} parent=0 // pred_region
    _
  $region5: #{tpu_custom_call.1} parent=0 // pred_fallthru
    _
  // Predicated region
  $region6: #{tpu_custom_call.1} parent=0 // pred_check
    _
  $region7: #{tpu_custom_call.1} parent=0 // pred_check_branch
    %14 = sbr.rel (0) target = $region9
  $region8: #{tpu_custom_call.1} parent=0 // pred_region
    _
  $region9: #{tpu_custom_call.1} parent=0 // pred_fallthru
    _
  // Predicated region
  $region10: #{tpu_custom_call.1} parent=0 // pred_check
    _
  $region11: #{tpu_custom_call.1} parent=0 // pred_check_branch
    %16 = sbr.rel (0) target = $region13
  $region12: #{tpu_custom_call.1} parent=0 // pred_region
    _
  $region13: #{tpu_custom_call.1} parent=0 // pred_fallthru
    _
  // Predicated region
  $region14: #{tpu_custom_call.1} parent=0 // pred_check
    _
  $region15: #{tpu_custom_call.1} parent=0 // pred_check_branch
    %18 = sbr.rel (0) target = $region17
  $region16: #{tpu_custom_call.1} parent=0 // pred_region
    _
  $region17: #{tpu_custom_call.1} parent=0 // pred_fallthru
    _
  // Predicated region
  $region18: #{tpu_custom_call.1} parent=0 // pred_check
    _
  $region19: #{tpu_custom_call.1} parent=0 // pred_check_branch
    %20 = sbr.rel (0) target = $region21
  $region20: #{tpu_custom_call.1} parent=0 // pred_region
    _
  $region21: #{tpu_custom_call.1} parent=0 // pred_fallthru
    _
  // Predicated region
  $region22: #{tpu_custom_call.1} parent=0 // pred_check
    _
  $region23: #{tpu_custom_call.1} parent=0 // pred_check_branch
    %22 = sbr.rel (0) target = $region25
  $region24: #{tpu_custom_call.1} parent=0 // pred_region
    _
  $region25: #{tpu_custom_call.1} parent=0 // pred_fallthru
    _
  %v23 = vld [vmem:[%s0] sm:$0xff]
  %v24 = vld [vmem:[%s0 + $0x8] sm:$0xff]
  %v25 = vld [vmem:[%s0 + $0x10] sm:$0xff]
  %v26 = vld [vmem:[%s0 + $0x18] sm:$0xff]
  %v27 = vld [vmem:[%s0 + $0x20] sm:$0xff]
  %v28 = vld [vmem:[%s0 + $0x28] sm:$0xff]
  %v29 = vld [vmem:[%s0 + $0x30] sm:$0xff]
  %v30 = vld [vmem:[%s0 + $0x38] sm:$0xff]
  %v31 = vld [vmem:[%s1] sm:$0xff]
  %v32 = vld [vmem:[%s1 + $0x8] sm:$0xff]
  %v33 = vld [vmem:[%s1 + $0x10] sm:$0xff]
  %v34 = vld [vmem:[%s1 + $0x18] sm:$0xff]
  %v35 = vld [vmem:[%s1 + $0x20] sm:$0xff]
  %v36 = vld [vmem:[%s1 + $0x28] sm:$0xff]
  %v37 = vld [vmem:[%s1 + $0x30] sm:$0xff]
  %v38 = vld [vmem:[%s1 + $0x38] sm:$0xff]
  %v39 = vld [vmem:[%s2] sm:$0xff]
  %v40 = vld [vmem:[%s2 + $0x8] sm:$0xff]
  %v41 = vld [vmem:[%s2 + $0x10] sm:$0xff]
  %v42 = vld [vmem:[%s2 + $0x18] sm:$0xff]
  %v43 = vld [vmem:[%s2 + $0x20] sm:$0xff]
  %v44 = vld [vmem:[%s2 + $0x28] sm:$0xff]
  %v45 = vld [vmem:[%s2 + $0x30] sm:$0xff]
  %v46 = vld [vmem:[%s2 + $0x38] sm:$0xff]
  %vm47 = vcmask 64512
  %v48 = vsel %vm47, %v23, 0.0
  %v49 = vsel %vm47, %v24, 0.0
  %v50 = vadd.f32 %v48, %v49
  %v51 = vsel %vm47, %v25, 0.0
  %v52 = vadd.f32 %v50, %v51
  %v53 = vsel %vm47, %v26, 0.0
  %v54 = vadd.f32 %v52, %v53
  %v55 = vrot.slane %v54, 4
  %v56 = vadd.f32 %v54, %v55
  %v57 = vrot.slane %v56, 2
  %v58 = vadd.f32 %v56, %v57
  %v59 = vrot.slane %v58, 1
  %v60 = vadd.f32 %v58, %v59
  %v61 = vrcp.pop 32.0
  %v62 = vmul.f32 %v60, %v61
  %v63 = vsub.f32 %v23, %v62
  %v64 = vsub.f32 %v24, %v62
  %v65 = vsub.f32 %v25, %v62
  %v66 = vsub.f32 %v26, %v62
  %v67 = vmul.f32 %v63, %v63
  %v68 = vmul.f32 %v64, %v64
  %v69 = vmul.f32 %v65, %v65
  %v70 = vmul.f32 %v66, %v66
  %v71 = vsel %vm47, %v67, 0.0
  %v72 = vsel %vm47, %v68, 0.0
  %v73 = vadd.f32 %v71, %v72
  %v74 = vsel %vm47, %v69, 0.0
  %v75 = vadd.f32 %v73, %v74
  %v76 = vsel %vm47, %v70, 0.0
  %v77 = vadd.f32 %v75, %v76
  %v78 = vrot.slane %v77, 4
  %v79 = vadd.f32 %v77, %v78
  %v80 = vrot.slane %v79, 2
  %v81 = vadd.f32 %v79, %v80
  %v82 = vrot.slane %v81, 1
  %v83 = vadd.f32 %v81, %v82
  %v84 = vmul.f32 %v83, %v61
  %v85 = vadd.f32 %v84, 1e-05
  %v86 = vrsqrt.pop %v85
  %v87 = vmul.f32 %v63, %v86
  %v88 = vmul.f32 %v64, %v86
  %v89 = vmul.f32 %v65, %v86
  %v90 = vmul.f32 %v66, %v86
  %92 = vset.pattern.permute.xlu0 0
  %93 = vperm.xlu0 %92, %v31
  %v94 = vpop.permute.xlu0 %93
  %97 = vset.pattern.permute.xlu0 0
  %98 = vperm.xlu0 %97, %v32
  %v99 = vpop.permute.xlu0 %98
  %102 = vset.pattern.permute.xlu0 0
  %103 = vperm.xlu0 %102, %v33
  %v104 = vpop.permute.xlu0 %103
  %107 = vset.pattern.permute.xlu0 0
  %108 = vperm.xlu0 %107, %v34
  %v109 = vpop.permute.xlu0 %108
  %v111 = vmul.f32 %v87, %v94
  %v112 = vmul.f32 %v88, %v99
  %v113 = vmul.f32 %v89, %v104
  %v114 = vmul.f32 %v90, %v109
  %116 = vset.pattern.permute.xlu0 0
  %117 = vperm.xlu0 %116, %v39
  %v118 = vpop.permute.xlu0 %117
  %121 = vset.pattern.permute.xlu0 0
  %122 = vperm.xlu0 %121, %v40
  %v123 = vpop.permute.xlu0 %122
  %126 = vset.pattern.permute.xlu0 0
  %127 = vperm.xlu0 %126, %v41
  %v128 = vpop.permute.xlu0 %127
  %131 = vset.pattern.permute.xlu0 0
  %132 = vperm.xlu0 %131, %v42
  %v133 = vpop.permute.xlu0 %132
  %v135 = vadd.f32 %v111, %v118
  %v136 = vadd.f32 %v112, %v123
  %v137 = vadd.f32 %v113, %v128
  %v138 = vadd.f32 %v114, %v133
  %v139 = vsel %vm47, %v27, 0.0
  %v140 = vsel %vm47, %v28, 0.0
  %v141 = vadd.f32 %v139, %v140
  %v142 = vsel %vm47, %v29, 0.0
  %v143 = vadd.f32 %v141, %v142
  %v144 = vsel %vm47, %v30, 0.0
  %v145 = vadd.f32 %v143, %v144
  %v146 = vrot.slane %v145, 4
  %v147 = vadd.f32 %v145, %v146
  %v148 = vrot.slane %v147, 2
  %v149 = vadd.f32 %v147, %v148
  %v150 = vrot.slane %v149, 1
  %v151 = vadd.f32 %v149, %v150
  %v152 = vmul.f32 %v151, %v61
  %v153 = vsub.f32 %v27, %v152
  %v154 = vsub.f32 %v28, %v152
  %v155 = vsub.f32 %v29, %v152
  %v156 = vsub.f32 %v30, %v152
  %v157 = vmul.f32 %v153, %v153
  %v158 = vmul.f32 %v154, %v154
  %v159 = vmul.f32 %v155, %v155
  %v160 = vmul.f32 %v156, %v156
  %v161 = vsel %vm47, %v157, 0.0
  %v162 = vsel %vm47, %v158, 0.0
  %v163 = vadd.f32 %v161, %v162
  %v164 = vsel %vm47, %v159, 0.0
  %v165 = vadd.f32 %v163, %v164
  %v166 = vsel %vm47, %v160, 0.0
  %v167 = vadd.f32 %v165, %v166
  %v168 = vrot.slane %v167, 4
  %v169 = vadd.f32 %v167, %v168
  %v170 = vrot.slane %v169, 2
  %v171 = vadd.f32 %v169, %v170
  %v172 = vrot.slane %v171, 1
  %v173 = vadd.f32 %v171, %v172
  %v174 = vmul.f32 %v173, %v61
  %v175 = vadd.f32 %v174, 1e-05
  %v176 = vrsqrt.pop %v175
  %v177 = vmul.f32 %v153, %v176
  %v178 = vmul.f32 %v154, %v176
  %v179 = vmul.f32 %v155, %v176
  %v180 = vmul.f32 %v156, %v176
  %182 = vset.pattern.permute.xlu0 0
  %183 = vperm.xlu0 %182, %v35
  %v184 = vpop.permute.xlu0 %183
  %187 = vset.pattern.permute.xlu0 0
  %188 = vperm.xlu0 %187, %v36
  %v189 = vpop.permute.xlu0 %188
  %192 = vset.pattern.permute.xlu0 0
  %193 = vperm.xlu0 %192, %v37
  %v194 = vpop.permute.xlu0 %193
  %197 = vset.pattern.permute.xlu0 0
  %198 = vperm.xlu0 %197, %v38
  %v199 = vpop.permute.xlu0 %198
  %v201 = vmul.f32 %v177, %v184
  %v202 = vmul.f32 %v178, %v189
  %v203 = vmul.f32 %v179, %v194
  %v204 = vmul.f32 %v180, %v199
  %206 = vset.pattern.permute.xlu0 0
  %207 = vperm.xlu0 %206, %v43
  %v208 = vpop.permute.xlu0 %207
  %211 = vset.pattern.permute.xlu0 0
  %212 = vperm.xlu0 %211, %v44
  %v213 = vpop.permute.xlu0 %212
  %216 = vset.pattern.permute.xlu0 0
  %217 = vperm.xlu0 %216, %v45
  %v218 = vpop.permute.xlu0 %217
  %221 = vset.pattern.permute.xlu0 0
  %222 = vperm.xlu0 %221, %v46
  %v223 = vpop.permute.xlu0 %222
  %v225 = vadd.f32 %v201, %v208
  %v226 = vadd.f32 %v202, %v213
  %v227 = vadd.f32 %v203, %v218
  %v228 = vadd.f32 %v204, %v223
  %v229 = vld [vmem:[%s3] sm:$0xff]
  %v230 = vld [vmem:[%s3 + $0x8] sm:$0xff]
  %v231 = vld [vmem:[%s4] sm:$0xff]
  %v232 = vld [vmem:[%s4 + $0x8] sm:$0xff]
  %vm233 = vcmask 261120
  %v235 = vsel %vm233, %v231, 0
  %v238 = vsel %vm233, %v232, 0
  %240 = vmatprep.subr.mxu0 0.0
  %241 = vmatpush1.msra.mxu0 0.0
  %242 = vmatprep.subr.mxu0 0.0
  %243 = vmatpush1.msra.mxu0 0.0
  %244 = vmatprep.subr.mxu0 0.0
  %245 = vmatpush1.msra.mxu0 0.0
  %246 = vmatprep.subr.mxu0 0.0
  %247 = vmatpush1.msra.mxu0 0.0
  %248 = vmatprep.subr.mxu0 0.0
  %249 = vmatpush1.msra.mxu0 0.0
  %250 = vmatprep.subr.mxu0 0.0
  %251 = vmatpush1.msra.mxu0 0.0
  %252 = vmatprep.subr.mxu0 0.0
  %253 = vmatpush1.msra.mxu0 0.0
  %254 = vmatprep.subr.mxu0 0.0
  %255 = vmatpush1.msra.mxu0 0.0
  %256 = vmatprep.subr.mxu0 0.0
  %257 = vmatpush1.msra.mxu0 0.0
  %258 = vmatprep.subr.mxu0 0.0
  %259 = vmatpush1.msra.mxu0 0.0
  %260 = vmatprep.subr.mxu0 0.0
  %261 = vmatpush1.msra.mxu0 0.0
  %262 = vmatprep.subr.mxu0 0.0
  %263 = vmatpush1.msra.mxu0 0.0
  %264 = vmatprep.subr.mxu0 0.0
  %v265 = vand.u32 %v228, 4294901760
  %266 = vmatpush1.msra.mxu0 %v265
  %267 = vmatprep.subr.mxu0 0.0
  %v268 = vand.u32 %v227, 4294901760
  %269 = vmatpush1.msra.mxu0 %v268
  %270 = vmatprep.subr.mxu0 0.0
  %v271 = vand.u32 %v226, 4294901760
  %272 = vmatpush1.msra.mxu0 %v271
  %273 = vmatprep.subr.mxu0 0.0
  %v274 = vand.u32 %v225, 4294901760
  %275 = vmatpush1.msra.mxu0 %v274
  %276 = vmatprep.subr.mxu0 0.0
  %277 = vmatpush2.msra.mxu0 0.0
  %278 = vmatprep.subr.mxu0 0.0
  %279 = vmatpush2.msra.mxu0 0.0
  %280 = vmatprep.subr.mxu0 0.0
  %281 = vmatpush2.msra.mxu0 0.0
  %282 = vmatprep.subr.mxu0 0.0
  %283 = vmatpush2.msra.mxu0 0.0
  %284 = vmatprep.subr.mxu0 0.0
  %285 = vmatpush2.msra.mxu0 0.0
  %286 = vmatprep.subr.mxu0 0.0
  %287 = vmatpush2.msra.mxu0 0.0
  %288 = vmatprep.subr.mxu0 0.0
  %289 = vmatpush2.msra.mxu0 0.0
  %290 = vmatprep.subr.mxu0 0.0
  %291 = vmatpush2.msra.mxu0 0.0
  %292 = vmatprep.subr.mxu0 0.0
  %293 = vmatpush2.msra.mxu0 0.0
  %294 = vmatprep.subr.mxu0 0.0
  %295 = vmatpush2.msra.mxu0 0.0
  %296 = vmatprep.subr.mxu0 0.0
  %297 = vmatpush2.msra.mxu0 0.0
  %298 = vmatprep.subr.mxu0 0.0
  %299 = vmatpush2.msra.mxu0 0.0
  %300 = vmatprep.subr.mxu0 0.0
  %301 = vmatpush2.msra.mxu0 0.0
  %302 = vmatprep.subr.mxu0 0.0
  %303 = vmatpush2.msra.mxu0 0.0
  %304 = vmatprep.subr.mxu0 0.0
  %305 = vmatpush2.msra.mxu0 0.0
  %306 = vmatprep.subr.mxu0 0.0
  %307 = vmatpush2.msra.mxu0 0.0
  %308 = vmatprep.mubr.f32.mxu0 0.0
  %v309 = vand.u32 %v235, 4294901760
  %v310 = vsub.f32 %v235, %v309
  %v311 = vand.u32 %v310, 4294901760
  %v312 = vsub.f32 %v310, %v311
  %v313 = vand.u32 %v312, 4294901760
  %314 = vmatmul.mubr.f32.gmra.mxu0 %v313
  %v315 = vpop.f32.mrf.mxu0
  %v316 = vadd.f32 0.0, %v315
  %v317 = vpop.f32.mrf.mxu0
  %318 = vmatprep.mubr.f32.mxu0 0.0
  %v319 = vand.u32 %v238, 4294901760
  %v320 = vsub.f32 %v238, %v319
  %v321 = vand.u32 %v320, 4294901760
  %v322 = vsub.f32 %v320, %v321
  %v323 = vand.u32 %v322, 4294901760
  %324 = vmatmul.mubr.f32.gmra.mxu0 %v323
  %v325 = vpop.f32.mrf.mxu0
  %v326 = vadd.f32 0.0, %v325
  %v327 = vpop.f32.mrf.mxu0
  %328 = vdwg.mxu0
  %329 = vmatprep.subr.mxu0 0.0
  %330 = vmatpush1.msra.mxu0 0.0
  %331 = vmatprep.subr.mxu0 0.0
  %332 = vmatpush1.msra.mxu0 0.0
  %333 = vmatprep.subr.mxu0 0.0
  %334 = vmatpush1.msra.mxu0 0.0
  %335 = vmatprep.subr.mxu0 0.0
  %336 = vmatpush1.msra.mxu0 0.0
  %337 = vmatprep.subr.mxu0 0.0
  %338 = vmatpush1.msra.mxu0 0.0
  %339 = vmatprep.subr.mxu0 0.0
  %340 = vmatpush1.msra.mxu0 0.0
  %341 = vmatprep.subr.mxu0 0.0
  %342 = vmatpush1.msra.mxu0 0.0
  %343 = vmatprep.subr.mxu0 0.0
  %344 = vmatpush1.msra.mxu0 0.0
  %345 = vmatprep.subr.mxu0 0.0
  %346 = vmatpush1.msra.mxu0 0.0
  %347 = vmatprep.subr.mxu0 0.0
  %348 = vmatpush1.msra.mxu0 0.0
  %349 = vmatprep.subr.mxu0 0.0
  %350 = vmatpush1.msra.mxu0 0.0
  %351 = vmatprep.subr.mxu0 0.0
  %352 = vmatpush1.msra.mxu0 0.0
  %353 = vmatprep.subr.mxu0 0.0
  %v354 = vand.u32 %v228, 4294901760
  %v355 = vsub.f32 %v228, %v354
  %v356 = vand.u32 %v355, 4294901760
  %v357 = vsub.f32 %v355, %v356
  %v358 = vand.u32 %v357, 4294901760
  %359 = vmatpush1.msra.mxu0 %v358
  %360 = vmatprep.subr.mxu0 0.0
  %v361 = vand.u32 %v227, 4294901760
  %v362 = vsub.f32 %v227, %v361
  %v363 = vand.u32 %v362, 4294901760
  %v364 = vsub.f32 %v362, %v363
  %v365 = vand.u32 %v364, 4294901760
  %366 = vmatpush1.msra.mxu0 %v365
  %367 = vmatprep.subr.mxu0 0.0
  %v368 = vand.u32 %v226, 4294901760
  %v369 = vsub.f32 %v226, %v368
  %v370 = vand.u32 %v369, 4294901760
  %v371 = vsub.f32 %v369, %v370
  %v372 = vand.u32 %v371, 4294901760
  %373 = vmatpush1.msra.mxu0 %v372
  %374 = vmatprep.subr.mxu0 0.0
  %v375 = vand.u32 %v225, 4294901760
  %v376 = vsub.f32 %v225, %v375
  %v377 = vand.u32 %v376, 4294901760
  %v378 = vsub.f32 %v376, %v377
  %v379 = vand.u32 %v378, 4294901760
  %380 = vmatpush1.msra.mxu0 %v379
  %381 = vmatprep.subr.mxu0 0.0
  %382 = vmatpush2.msra.mxu0 0.0
  %383 = vmatprep.subr.mxu0 0.0
  %384 = vmatpush2.msra.mxu0 0.0
  %385 = vmatprep.subr.mxu0 0.0
  %386 = vmatpush2.msra.mxu0 0.0
  %387 = vmatprep.subr.mxu0 0.0
  %388 = vmatpush2.msra.mxu0 0.0
  %389 = vmatprep.subr.mxu0 0.0
  %390 = vmatpush2.msra.mxu0 0.0
  %391 = vmatprep.subr.mxu0 0.0
  %392 = vmatpush2.msra.mxu0 0.0
  %393 = vmatprep.subr.mxu0 0.0
  %394 = vmatpush2.msra.mxu0 0.0
  %395 = vmatprep.subr.mxu0 0.0
  %396 = vmatpush2.msra.mxu0 0.0
  %397 = vmatprep.subr.mxu0 0.0
  %398 = vmatpush2.msra.mxu0 0.0
  %399 = vmatprep.subr.mxu0 0.0
  %400 = vmatpush2.msra.mxu0 0.0
  %401 = vmatprep.subr.mxu0 0.0
  %402 = vmatpush2.msra.mxu0 0.0
  %403 = vmatprep.subr.mxu0 0.0
  %404 = vmatpush2.msra.mxu0 0.0
  %405 = vmatprep.subr.mxu0 0.0
  %406 = vmatpush2.msra.mxu0 0.0
  %407 = vmatprep.subr.mxu0 0.0
  %408 = vmatpush2.msra.mxu0 0.0
  %409 = vmatprep.subr.mxu0 0.0
  %410 = vmatpush2.msra.mxu0 0.0
  %411 = vmatprep.subr.mxu0 0.0
  %412 = vmatpush2.msra.mxu0 0.0
  %413 = vmatprep.mubr.f32.mxu0 0.0
  %v414 = vand.u32 %v235, 4294901760
  %415 = vmatmul.mubr.f32.gmra.mxu0 %v414
  %v416 = vpop.f32.mrf.mxu0
  %v417 = vadd.f32 %v316, %v416
  %v418 = vpop.f32.mrf.mxu0
  %419 = vmatprep.mubr.f32.mxu0 0.0
  %v420 = vand.u32 %v238, 4294901760
  %421 = vmatmul.mubr.f32.gmra.mxu0 %v420
  %v422 = vpop.f32.mrf.mxu0
  %v423 = vadd.f32 %v326, %v422
  %v424 = vpop.f32.mrf.mxu0
  %425 = vdwg.mxu0
  %426 = vmatprep.subr.mxu0 0.0
  %427 = vmatpush1.msra.mxu0 0.0
  %428 = vmatprep.subr.mxu0 0.0
  %429 = vmatpush1.msra.mxu0 0.0
  %430 = vmatprep.subr.mxu0 0.0
  %431 = vmatpush1.msra.mxu0 0.0
  %432 = vmatprep.subr.mxu0 0.0
  %433 = vmatpush1.msra.mxu0 0.0
  %434 = vmatprep.subr.mxu0 0.0
  %435 = vmatpush1.msra.mxu0 0.0
  %436 = vmatprep.subr.mxu0 0.0
  %437 = vmatpush1.msra.mxu0 0.0
  %438 = vmatprep.subr.mxu0 0.0
  %439 = vmatpush1.msra.mxu0 0.0
  %440 = vmatprep.subr.mxu0 0.0
  %441 = vmatpush1.msra.mxu0 0.0
  %442 = vmatprep.subr.mxu0 0.0
  %443 = vmatpush1.msra.mxu0 0.0
  %444 = vmatprep.subr.mxu0 0.0
  %445 = vmatpush1.msra.mxu0 0.0
  %446 = vmatprep.subr.mxu0 0.0
  %447 = vmatpush1.msra.mxu0 0.0
  %448 = vmatprep.subr.mxu0 0.0
  %449 = vmatpush1.msra.mxu0 0.0
  %450 = vmatprep.subr.mxu0 0.0
  %v451 = vand.u32 %v228, 4294901760
  %v452 = vsub.f32 %v228, %v451
  %453 = vmatpush1.msra.mxu0 %v452
  %454 = vmatprep.subr.mxu0 0.0
  %v455 = vand.u32 %v227, 4294901760
  %v456 = vsub.f32 %v227, %v455
  %457 = vmatpush1.msra.mxu0 %v456
  %458 = vmatprep.subr.mxu0 0.0
  %v459 = vand.u32 %v226, 4294901760
  %v460 = vsub.f32 %v226, %v459
  %461 = vmatpush1.msra.mxu0 %v460
  %462 = vmatprep.subr.mxu0 0.0
  %v463 = vand.u32 %v225, 4294901760
  %v464 = vsub.f32 %v225, %v463
  %465 = vmatpush1.msra.mxu0 %v464
  %466 = vmatprep.subr.mxu0 0.0
  %467 = vmatpush2.msra.mxu0 0.0
  %468 = vmatprep.subr.mxu0 0.0
  %469 = vmatpush2.msra.mxu0 0.0
  %470 = vmatprep.subr.mxu0 0.0
  %471 = vmatpush2.msra.mxu0 0.0
  %472 = vmatprep.subr.mxu0 0.0
  %473 = vmatpush2.msra.mxu0 0.0
  %474 = vmatprep.subr.mxu0 0.0
  %475 = vmatpush2.msra.mxu0 0.0
  %476 = vmatprep.subr.mxu0 0.0
  %477 = vmatpush2.msra.mxu0 0.0
  %478 = vmatprep.subr.mxu0 0.0
  %479 = vmatpush2.msra.mxu0 0.0
  %480 = vmatprep.subr.mxu0 0.0
  %481 = vmatpush2.msra.mxu0 0.0
  %482 = vmatprep.subr.mxu0 0.0
  %483 = vmatpush2.msra.mxu0 0.0
  %484 = vmatprep.subr.mxu0 0.0
  %485 = vmatpush2.msra.mxu0 0.0
  %486 = vmatprep.subr.mxu0 0.0
  %487 = vmatpush2.msra.mxu0 0.0
  %488 = vmatprep.subr.mxu0 0.0
  %489 = vmatpush2.msra.mxu0 0.0
  %490 = vmatprep.subr.mxu0 0.0
  %491 = vmatpush2.msra.mxu0 0.0
  %492 = vmatprep.subr.mxu0 0.0
  %493 = vmatpush2.msra.mxu0 0.0
  %494 = vmatprep.subr.mxu0 0.0
  %495 = vmatpush2.msra.mxu0 0.0
  %496 = vmatprep.subr.mxu0 0.0
  %497 = vmatpush2.msra.mxu0 0.0
  %498 = vmatprep.mubr.f32.mxu0 0.0
  %v499 = vand.u32 %v235, 4294901760
  %v500 = vsub.f32 %v235, %v499
  %501 = vmatmul.mubr.f32.gmra.mxu0 %v500
  %v502 = vpop.f32.mrf.mxu0
  %v503 = vadd.f32 %v417, %v502
  %v504 = vpop.f32.mrf.mxu0
  %505 = vmatprep.mubr.f32.mxu0 0.0
  %v506 = vand.u32 %v238, 4294901760
  %v507 = vsub.f32 %v238, %v506
  %508 = vmatmul.mubr.f32.gmra.mxu0 %v507
  %v509 = vpop.f32.mrf.mxu0
  %v510 = vadd.f32 %v423, %v509
  %v511 = vpop.f32.mrf.mxu0
  %512 = vdwg.mxu0
  %513 = vmatprep.subr.mxu0 0.0
  %514 = vmatpush1.msra.mxu0 0.0
  %515 = vmatprep.subr.mxu0 0.0
  %516 = vmatpush1.msra.mxu0 0.0
  %517 = vmatprep.subr.mxu0 0.0
  %518 = vmatpush1.msra.mxu0 0.0
  %519 = vmatprep.subr.mxu0 0.0
  %520 = vmatpush1.msra.mxu0 0.0
  %521 = vmatprep.subr.mxu0 0.0
  %522 = vmatpush1.msra.mxu0 0.0
  %523 = vmatprep.subr.mxu0 0.0
  %524 = vmatpush1.msra.mxu0 0.0
  %525 = vmatprep.subr.mxu0 0.0
  %526 = vmatpush1.msra.mxu0 0.0
  %527 = vmatprep.subr.mxu0 0.0
  %528 = vmatpush1.msra.mxu0 0.0
  %529 = vmatprep.subr.mxu0 0.0
  %530 = vmatpush1.msra.mxu0 0.0
  %531 = vmatprep.subr.mxu0 0.0
  %532 = vmatpush1.msra.mxu0 0.0
  %533 = vmatprep.subr.mxu0 0.0
  %534 = vmatpush1.msra.mxu0 0.0
  %535 = vmatprep.subr.mxu0 0.0
  %536 = vmatpush1.msra.mxu0 0.0
  %537 = vmatprep.subr.mxu0 0.0
  %v538 = vand.u32 %v228, 4294901760
  %539 = vmatpush1.msra.mxu0 %v538
  %540 = vmatprep.subr.mxu0 0.0
  %v541 = vand.u32 %v227, 4294901760
  %542 = vmatpush1.msra.mxu0 %v541
  %543 = vmatprep.subr.mxu0 0.0
  %v544 = vand.u32 %v226, 4294901760
  %545 = vmatpush1.msra.mxu0 %v544
  %546 = vmatprep.subr.mxu0 0.0
  %v547 = vand.u32 %v225, 4294901760
  %548 = vmatpush1.msra.mxu0 %v547
  %549 = vmatprep.subr.mxu0 0.0
  %550 = vmatpush2.msra.mxu0 0.0
  %551 = vmatprep.subr.mxu0 0.0
  %552 = vmatpush2.msra.mxu0 0.0
  %553 = vmatprep.subr.mxu0 0.0
  %554 = vmatpush2.msra.mxu0 0.0
  %555 = vmatprep.subr.mxu0 0.0
  %556 = vmatpush2.msra.mxu0 0.0
  %557 = vmatprep.subr.mxu0 0.0
  %558 = vmatpush2.msra.mxu0 0.0
  %559 = vmatprep.subr.mxu0 0.0
  %560 = vmatpush2.msra.mxu0 0.0
  %561 = vmatprep.subr.mxu0 0.0
  %562 = vmatpush2.msra.mxu0 0.0
  %563 = vmatprep.subr.mxu0 0.0
  %564 = vmatpush2.msra.mxu0 0.0
  %565 = vmatprep.subr.mxu0 0.0
  %566 = vmatpush2.msra.mxu0 0.0
  %567 = vmatprep.subr.mxu0 0.0
  %568 = vmatpush2.msra.mxu0 0.0
  %569 = vmatprep.subr.mxu0 0.0
  %570 = vmatpush2.msra.mxu0 0.0
  %571 = vmatprep.subr.mxu0 0.0
  %572 = vmatpush2.msra.mxu0 0.0
  %573 = vmatprep.subr.mxu0 0.0
  %574 = vmatpush2.msra.mxu0 0.0
  %575 = vmatprep.subr.mxu0 0.0
  %576 = vmatpush2.msra.mxu0 0.0
  %577 = vmatprep.subr.mxu0 0.0
  %578 = vmatpush2.msra.mxu0 0.0
  %579 = vmatprep.subr.mxu0 0.0
  %580 = vmatpush2.msra.mxu0 0.0
  %581 = vmatprep.mubr.f32.mxu0 0.0
  %v582 = vand.u32 %v235, 4294901760
  %v583 = vsub.f32 %v235, %v582
  %v584 = vand.u32 %v583, 4294901760
  %585 = vmatmul.mubr.f32.gmra.mxu0 %v584
  %v586 = vpop.f32.mrf.mxu0
  %v587 = vadd.f32 %v503, %v586
  %v588 = vpop.f32.mrf.mxu0
  %589 = vmatprep.mubr.f32.mxu0 0.0
  %v590 = vand.u32 %v238, 4294901760
  %v591 = vsub.f32 %v238, %v590
  %v592 = vand.u32 %v591, 4294901760
  %593 = vmatmul.mubr.f32.gmra.mxu0 %v592
  %v594 = vpop.f32.mrf.mxu0
  %v595 = vadd.f32 %v510, %v594
  %v596 = vpop.f32.mrf.mxu0
  %597 = vdwg.mxu0
  %598 = vmatprep.subr.mxu0 0.0
  %599 = vmatpush1.msra.mxu0 0.0
  %600 = vmatprep.subr.mxu0 0.0
  %601 = vmatpush1.msra.mxu0 0.0
  %602 = vmatprep.subr.mxu0 0.0
  %603 = vmatpush1.msra.mxu0 0.0
  %604 = vmatprep.subr.mxu0 0.0
  %605 = vmatpush1.msra.mxu0 0.0
  %606 = vmatprep.subr.mxu0 0.0
  %607 = vmatpush1.msra.mxu0 0.0
  %608 = vmatprep.subr.mxu0 0.0
  %609 = vmatpush1.msra.mxu0 0.0
  %610 = vmatprep.subr.mxu0 0.0
  %611 = vmatpush1.msra.mxu0 0.0
  %612 = vmatprep.subr.mxu0 0.0
  %613 = vmatpush1.msra.mxu0 0.0
  %614 = vmatprep.subr.mxu0 0.0
  %615 = vmatpush1.msra.mxu0 0.0
  %616 = vmatprep.subr.mxu0 0.0
  %617 = vmatpush1.msra.mxu0 0.0
  %618 = vmatprep.subr.mxu0 0.0
  %619 = vmatpush1.msra.mxu0 0.0
  %620 = vmatprep.subr.mxu0 0.0
  %621 = vmatpush1.msra.mxu0 0.0
  %622 = vmatprep.subr.mxu0 0.0
  %v623 = vand.u32 %v228, 4294901760
  %v624 = vsub.f32 %v228, %v623
  %v625 = vand.u32 %v624, 4294901760
  %626 = vmatpush1.msra.mxu0 %v625
  %627 = vmatprep.subr.mxu0 0.0
  %v628 = vand.u32 %v227, 4294901760
  %v629 = vsub.f32 %v227, %v628
  %v630 = vand.u32 %v629, 4294901760
  %631 = vmatpush1.msra.mxu0 %v630
  %632 = vmatprep.subr.mxu0 0.0
  %v633 = vand.u32 %v226, 4294901760
  %v634 = vsub.f32 %v226, %v633
  %v635 = vand.u32 %v634, 4294901760
  %636 = vmatpush1.msra.mxu0 %v635
  %637 = vmatprep.subr.mxu0 0.0
  %v638 = vand.u32 %v225, 4294901760
  %v639 = vsub.f32 %v225, %v638
  %v640 = vand.u32 %v639, 4294901760
  %641 = vmatpush1.msra.mxu0 %v640
  %642 = vmatprep.subr.mxu0 0.0
  %643 = vmatpush2.msra.mxu0 0.0
  %644 = vmatprep.subr.mxu0 0.0
  %645 = vmatpush2.msra.mxu0 0.0
  %646 = vmatprep.subr.mxu0 0.0
  %647 = vmatpush2.msra.mxu0 0.0
  %648 = vmatprep.subr.mxu0 0.0
  %649 = vmatpush2.msra.mxu0 0.0
  %650 = vmatprep.subr.mxu0 0.0
  %651 = vmatpush2.msra.mxu0 0.0
  %652 = vmatprep.subr.mxu0 0.0
  %653 = vmatpush2.msra.mxu0 0.0
  %654 = vmatprep.subr.mxu0 0.0
  %655 = vmatpush2.msra.mxu0 0.0
  %656 = vmatprep.subr.mxu0 0.0
  %657 = vmatpush2.msra.mxu0 0.0
  %658 = vmatprep.subr.mxu0 0.0
  %659 = vmatpush2.msra.mxu0 0.0
  %660 = vmatprep.subr.mxu0 0.0
  %661 = vmatpush2.msra.mxu0 0.0
  %662 = vmatprep.subr.mxu0 0.0
  %663 = vmatpush2.msra.mxu0 0.0
  %664 = vmatprep.subr.mxu0 0.0
  %665 = vmatpush2.msra.mxu0 0.0
  %666 = vmatprep.subr.mxu0 0.0
  %667 = vmatpush2.msra.mxu0 0.0
  %668 = vmatprep.subr.mxu0 0.0
  %669 = vmatpush2.msra.mxu0 0.0
  %670 = vmatprep.subr.mxu0 0.0
  %671 = vmatpush2.msra.mxu0 0.0
  %672 = vmatprep.subr.mxu0 0.0
  %673 = vmatpush2.msra.mxu0 0.0
  %674 = vmatprep.mubr.f32.mxu0 0.0
  %v675 = vand.u32 %v235, 4294901760
  %676 = vmatmul.mubr.f32.gmra.mxu0 %v675
  %v677 = vpop.f32.mrf.mxu0
  %v678 = vadd.f32 %v587, %v677
  %v679 = vpop.f32.mrf.mxu0
  %680 = vmatprep.mubr.f32.mxu0 0.0
  %v681 = vand.u32 %v238, 4294901760
  %682 = vmatmul.mubr.f32.gmra.mxu0 %v681
  %v683 = vpop.f32.mrf.mxu0
  %v684 = vadd.f32 %v595, %v683
  %v685 = vpop.f32.mrf.mxu0
  %686 = vdwg.mxu0
  %687 = vmatprep.subr.mxu0 0.0
  %688 = vmatpush1.msra.mxu0 0.0
  %689 = vmatprep.subr.mxu0 0.0
  %690 = vmatpush1.msra.mxu0 0.0
  %691 = vmatprep.subr.mxu0 0.0
  %692 = vmatpush1.msra.mxu0 0.0
  %693 = vmatprep.subr.mxu0 0.0
  %694 = vmatpush1.msra.mxu0 0.0
  %695 = vmatprep.subr.mxu0 0.0
  %696 = vmatpush1.msra.mxu0 0.0
  %697 = vmatprep.subr.mxu0 0.0
  %698 = vmatpush1.msra.mxu0 0.0
  %699 = vmatprep.subr.mxu0 0.0
  %700 = vmatpush1.msra.mxu0 0.0
  %701 = vmatprep.subr.mxu0 0.0
  %702 = vmatpush1.msra.mxu0 0.0
  %703 = vmatprep.subr.mxu0 0.0
  %704 = vmatpush1.msra.mxu0 0.0
  %705 = vmatprep.subr.mxu0 0.0
  %706 = vmatpush1.msra.mxu0 0.0
  %707 = vmatprep.subr.mxu0 0.0
  %708 = vmatpush1.msra.mxu0 0.0
  %709 = vmatprep.subr.mxu0 0.0
  %710 = vmatpush1.msra.mxu0 0.0
  %711 = vmatprep.subr.mxu0 0.0
  %v712 = vand.u32 %v228, 4294901760
  %713 = vmatpush1.msra.mxu0 %v712
  %714 = vmatprep.subr.mxu0 0.0
  %v715 = vand.u32 %v227, 4294901760
  %716 = vmatpush1.msra.mxu0 %v715
  %717 = vmatprep.subr.mxu0 0.0
  %v718 = vand.u32 %v226, 4294901760
  %719 = vmatpush1.msra.mxu0 %v718
  %720 = vmatprep.subr.mxu0 0.0
  %v721 = vand.u32 %v225, 4294901760
  %722 = vmatpush1.msra.mxu0 %v721
  %723 = vmatprep.subr.mxu0 0.0
  %724 = vmatpush2.msra.mxu0 0.0
  %725 = vmatprep.subr.mxu0 0.0
  %726 = vmatpush2.msra.mxu0 0.0
  %727 = vmatprep.subr.mxu0 0.0
  %728 = vmatpush2.msra.mxu0 0.0
  %729 = vmatprep.subr.mxu0 0.0
  %730 = vmatpush2.msra.mxu0 0.0
  %731 = vmatprep.subr.mxu0 0.0
  %732 = vmatpush2.msra.mxu0 0.0
  %733 = vmatprep.subr.mxu0 0.0
  %734 = vmatpush2.msra.mxu0 0.0
  %735 = vmatprep.subr.mxu0 0.0
  %736 = vmatpush2.msra.mxu0 0.0
  %737 = vmatprep.subr.mxu0 0.0
  %738 = vmatpush2.msra.mxu0 0.0
  %739 = vmatprep.subr.mxu0 0.0
  %740 = vmatpush2.msra.mxu0 0.0
  %741 = vmatprep.subr.mxu0 0.0
  %742 = vmatpush2.msra.mxu0 0.0
  %743 = vmatprep.subr.mxu0 0.0
  %744 = vmatpush2.msra.mxu0 0.0
  %745 = vmatprep.subr.mxu0 0.0
  %746 = vmatpush2.msra.mxu0 0.0
  %747 = vmatprep.subr.mxu0 0.0
  %748 = vmatpush2.msra.mxu0 0.0
  %749 = vmatprep.subr.mxu0 0.0
  %750 = vmatpush2.msra.mxu0 0.0
  %751 = vmatprep.subr.mxu0 0.0
  %752 = vmatpush2.msra.mxu0 0.0
  %753 = vmatprep.subr.mxu0 0.0
  %754 = vmatpush2.msra.mxu0 0.0
  %755 = vmatprep.mubr.f32.mxu0 0.0
  %v756 = vand.u32 %v235, 4294901760
  %757 = vmatmul.mubr.f32.gmra.mxu0 %v756
  %v758 = vpop.f32.mrf.mxu0
  %v759 = vadd.f32 %v678, %v758
  %v760 = vpop.f32.mrf.mxu0
  %761 = vmatprep.mubr.f32.mxu0 0.0
  %v762 = vand.u32 %v238, 4294901760
  %763 = vmatmul.mubr.f32.gmra.mxu0 %v762
  %v764 = vpop.f32.mrf.mxu0
  %v765 = vadd.f32 %v684, %v764
  %v766 = vpop.f32.mrf.mxu0
  %767 = vdwg.mxu0
  %v769 = vsel %vm233, %v229, 0
  %v772 = vsel %vm233, %v230, 0
  %774 = vmatprep.subr.mxu0 0.0
  %775 = vmatpush1.msra.mxu0 0.0
  %776 = vmatprep.subr.mxu0 0.0
  %777 = vmatpush1.msra.mxu0 0.0
  %778 = vmatprep.subr.mxu0 0.0
  %779 = vmatpush1.msra.mxu0 0.0
  %780 = vmatprep.subr.mxu0 0.0
  %781 = vmatpush1.msra.mxu0 0.0
  %782 = vmatprep.subr.mxu0 0.0
  %783 = vmatpush1.msra.mxu0 0.0
  %784 = vmatprep.subr.mxu0 0.0
  %785 = vmatpush1.msra.mxu0 0.0
  %786 = vmatprep.subr.mxu0 0.0
  %787 = vmatpush1.msra.mxu0 0.0
  %788 = vmatprep.subr.mxu0 0.0
  %789 = vmatpush1.msra.mxu0 0.0
  %790 = vmatprep.subr.mxu0 0.0
  %791 = vmatpush1.msra.mxu0 0.0
  %792 = vmatprep.subr.mxu0 0.0
  %793 = vmatpush1.msra.mxu0 0.0
  %794 = vmatprep.subr.mxu0 0.0
  %795 = vmatpush1.msra.mxu0 0.0
  %796 = vmatprep.subr.mxu0 0.0
  %797 = vmatpush1.msra.mxu0 0.0
  %798 = vmatprep.subr.mxu0 0.0
  %v799 = vand.u32 %v138, 4294901760
  %800 = vmatpush1.msra.mxu0 %v799
  %801 = vmatprep.subr.mxu0 0.0
  %v802 = vand.u32 %v137, 4294901760
  %803 = vmatpush1.msra.mxu0 %v802
  %804 = vmatprep.subr.mxu0 0.0
  %v805 = vand.u32 %v136, 4294901760
  %806 = vmatpush1.msra.mxu0 %v805
  %807 = vmatprep.subr.mxu0 0.0
  %v808 = vand.u32 %v135, 4294901760
  %809 = vmatpush1.msra.mxu0 %v808
  %810 = vmatprep.subr.mxu0 0.0
  %811 = vmatpush2.msra.mxu0 0.0
  %812 = vmatprep.subr.mxu0 0.0
  %813 = vmatpush2.msra.mxu0 0.0
  %814 = vmatprep.subr.mxu0 0.0
  %815 = vmatpush2.msra.mxu0 0.0
  %816 = vmatprep.subr.mxu0 0.0
  %817 = vmatpush2.msra.mxu0 0.0
  %818 = vmatprep.subr.mxu0 0.0
  %819 = vmatpush2.msra.mxu0 0.0
  %820 = vmatprep.subr.mxu0 0.0
  %821 = vmatpush2.msra.mxu0 0.0
  %822 = vmatprep.subr.mxu0 0.0
  %823 = vmatpush2.msra.mxu0 0.0
  %824 = vmatprep.subr.mxu0 0.0
  %825 = vmatpush2.msra.mxu0 0.0
  %826 = vmatprep.subr.mxu0 0.0
  %827 = vmatpush2.msra.mxu0 0.0
  %828 = vmatprep.subr.mxu0 0.0
  %829 = vmatpush2.msra.mxu0 0.0
  %830 = vmatprep.subr.mxu0 0.0
  %831 = vmatpush2.msra.mxu0 0.0
  %832 = vmatprep.subr.mxu0 0.0
  %833 = vmatpush2.msra.mxu0 0.0
  %834 = vmatprep.subr.mxu0 0.0
  %835 = vmatpush2.msra.mxu0 0.0
  %836 = vmatprep.subr.mxu0 0.0
  %837 = vmatpush2.msra.mxu0 0.0
  %838 = vmatprep.subr.mxu0 0.0
  %839 = vmatpush2.msra.mxu0 0.0
  %840 = vmatprep.subr.mxu0 0.0
  %841 = vmatpush2.msra.mxu0 0.0
  %842 = vmatprep.mubr.f32.mxu0 0.0
  %v843 = vand.u32 %v769, 4294901760
  %v844 = vsub.f32 %v769, %v843
  %v845 = vand.u32 %v844, 4294901760
  %v846 = vsub.f32 %v844, %v845
  %v847 = vand.u32 %v846, 4294901760
  %848 = vmatmul.mubr.f32.gmra.mxu0 %v847
  %v849 = vpop.f32.mrf.mxu0
  %v850 = vadd.f32 %v759, %v849
  %v851 = vpop.f32.mrf.mxu0
  %852 = vmatprep.mubr.f32.mxu0 0.0
  %v853 = vand.u32 %v772, 4294901760
  %v854 = vsub.f32 %v772, %v853
  %v855 = vand.u32 %v854, 4294901760
  %v856 = vsub.f32 %v854, %v855
  %v857 = vand.u32 %v856, 4294901760
  %858 = vmatmul.mubr.f32.gmra.mxu0 %v857
  %v859 = vpop.f32.mrf.mxu0
  %v860 = vadd.f32 %v765, %v859
  %v861 = vpop.f32.mrf.mxu0
  %862 = vdwg.mxu0
  %863 = vmatprep.subr.mxu0 0.0
  %864 = vmatpush1.msra.mxu0 0.0
  %865 = vmatprep.subr.mxu0 0.0
  %866 = vmatpush1.msra.mxu0 0.0
  %867 = vmatprep.subr.mxu0 0.0
  %868 = vmatpush1.msra.mxu0 0.0
  %869 = vmatprep.subr.mxu0 0.0
  %870 = vmatpush1.msra.mxu0 0.0
  %871 = vmatprep.subr.mxu0 0.0
  %872 = vmatpush1.msra.mxu0 0.0
  %873 = vmatprep.subr.mxu0 0.0
  %874 = vmatpush1.msra.mxu0 0.0
  %875 = vmatprep.subr.mxu0 0.0
  %876 = vmatpush1.msra.mxu0 0.0
  %877 = vmatprep.subr.mxu0 0.0
  %878 = vmatpush1.msra.mxu0 0.0
  %879 = vmatprep.subr.mxu0 0.0
  %880 = vmatpush1.msra.mxu0 0.0
  %881 = vmatprep.subr.mxu0 0.0
  %882 = vmatpush1.msra.mxu0 0.0
  %883 = vmatprep.subr.mxu0 0.0
  %884 = vmatpush1.msra.mxu0 0.0
  %885 = vmatprep.subr.mxu0 0.0
  %886 = vmatpush1.msra.mxu0 0.0
  %887 = vmatprep.subr.mxu0 0.0
  %v888 = vand.u32 %v138, 4294901760
  %v889 = vsub.f32 %v138, %v888
  %v890 = vand.u32 %v889, 4294901760
  %v891 = vsub.f32 %v889, %v890
  %v892 = vand.u32 %v891, 4294901760
  %893 = vmatpush1.msra.mxu0 %v892
  %894 = vmatprep.subr.mxu0 0.0
  %v895 = vand.u32 %v137, 4294901760
  %v896 = vsub.f32 %v137, %v895
  %v897 = vand.u32 %v896, 4294901760
  %v898 = vsub.f32 %v896, %v897
  %v899 = vand.u32 %v898, 4294901760
  %900 = vmatpush1.msra.mxu0 %v899
  %901 = vmatprep.subr.mxu0 0.0
  %v902 = vand.u32 %v136, 4294901760
  %v903 = vsub.f32 %v136, %v902
  %v904 = vand.u32 %v903, 4294901760
  %v905 = vsub.f32 %v903, %v904
  %v906 = vand.u32 %v905, 4294901760
  %907 = vmatpush1.msra.mxu0 %v906
  %908 = vmatprep.subr.mxu0 0.0
  %v909 = vand.u32 %v135, 4294901760
  %v910 = vsub.f32 %v135, %v909
  %v911 = vand.u32 %v910, 4294901760
  %v912 = vsub.f32 %v910, %v911
  %v913 = vand.u32 %v912, 4294901760
  %914 = vmatpush1.msra.mxu0 %v913
  %915 = vmatprep.subr.mxu0 0.0
  %916 = vmatpush2.msra.mxu0 0.0
  %917 = vmatprep.subr.mxu0 0.0
  %918 = vmatpush2.msra.mxu0 0.0
  %919 = vmatprep.subr.mxu0 0.0
  %920 = vmatpush2.msra.mxu0 0.0
  %921 = vmatprep.subr.mxu0 0.0
  %922 = vmatpush2.msra.mxu0 0.0
  %923 = vmatprep.subr.mxu0 0.0
  %924 = vmatpush2.msra.mxu0 0.0
  %925 = vmatprep.subr.mxu0 0.0
  %926 = vmatpush2.msra.mxu0 0.0
  %927 = vmatprep.subr.mxu0 0.0
  %928 = vmatpush2.msra.mxu0 0.0
  %929 = vmatprep.subr.mxu0 0.0
  %930 = vmatpush2.msra.mxu0 0.0
  %931 = vmatprep.subr.mxu0 0.0
  %932 = vmatpush2.msra.mxu0 0.0
  %933 = vmatprep.subr.mxu0 0.0
  %934 = vmatpush2.msra.mxu0 0.0
  %935 = vmatprep.subr.mxu0 0.0
  %936 = vmatpush2.msra.mxu0 0.0
  %937 = vmatprep.subr.mxu0 0.0
  %938 = vmatpush2.msra.mxu0 0.0
  %939 = vmatprep.subr.mxu0 0.0
  %940 = vmatpush2.msra.mxu0 0.0
  %941 = vmatprep.subr.mxu0 0.0
  %942 = vmatpush2.msra.mxu0 0.0
  %943 = vmatprep.subr.mxu0 0.0
  %944 = vmatpush2.msra.mxu0 0.0
  %945 = vmatprep.subr.mxu0 0.0
  %946 = vmatpush2.msra.mxu0 0.0
  %947 = vmatprep.mubr.f32.mxu0 0.0
  %v948 = vand.u32 %v769, 4294901760
  %949 = vmatmul.mubr.f32.gmra.mxu0 %v948
  %v950 = vpop.f32.mrf.mxu0
  %v951 = vadd.f32 %v850, %v950
  %v952 = vpop.f32.mrf.mxu0
  %953 = vmatprep.mubr.f32.mxu0 0.0
  %v954 = vand.u32 %v772, 4294901760
  %955 = vmatmul.mubr.f32.gmra.mxu0 %v954
  %v956 = vpop.f32.mrf.mxu0
  %v957 = vadd.f32 %v860, %v956
  %v958 = vpop.f32.mrf.mxu0
  %959 = vdwg.mxu0
  %960 = vmatprep.subr.mxu0 0.0
  %961 = vmatpush1.msra.mxu0 0.0
  %962 = vmatprep.subr.mxu0 0.0
  %963 = vmatpush1.msra.mxu0 0.0
  %964 = vmatprep.subr.mxu0 0.0
  %965 = vmatpush1.msra.mxu0 0.0
  %966 = vmatprep.subr.mxu0 0.0
  %967 = vmatpush1.msra.mxu0 0.0
  %968 = vmatprep.subr.mxu0 0.0
  %969 = vmatpush1.msra.mxu0 0.0
  %970 = vmatprep.subr.mxu0 0.0
  %971 = vmatpush1.msra.mxu0 0.0
  %972 = vmatprep.subr.mxu0 0.0
  %973 = vmatpush1.msra.mxu0 0.0
  %974 = vmatprep.subr.mxu0 0.0
  %975 = vmatpush1.msra.mxu0 0.0
  %976 = vmatprep.subr.mxu0 0.0
  %977 = vmatpush1.msra.mxu0 0.0
  %978 = vmatprep.subr.mxu0 0.0
  %979 = vmatpush1.msra.mxu0 0.0
  %980 = vmatprep.subr.mxu0 0.0
  %981 = vmatpush1.msra.mxu0 0.0
  %982 = vmatprep.subr.mxu0 0.0
  %983 = vmatpush1.msra.mxu0 0.0
  %984 = vmatprep.subr.mxu0 0.0
  %v985 = vand.u32 %v138, 4294901760
  %v986 = vsub.f32 %v138, %v985
  %987 = vmatpush1.msra.mxu0 %v986
  %988 = vmatprep.subr.mxu0 0.0
  %v989 = vand.u32 %v137, 4294901760
  %v990 = vsub.f32 %v137, %v989
  %991 = vmatpush1.msra.mxu0 %v990
  %992 = vmatprep.subr.mxu0 0.0
  %v993 = vand.u32 %v136, 4294901760
  %v994 = vsub.f32 %v136, %v993
  %995 = vmatpush1.msra.mxu0 %v994
  %996 = vmatprep.subr.mxu0 0.0
  %v997 = vand.u32 %v135, 4294901760
  %v998 = vsub.f32 %v135, %v997
  %999 = vmatpush1.msra.mxu0 %v998
  %1000 = vmatprep.subr.mxu0 0.0
  %1001 = vmatpush2.msra.mxu0 0.0
  %1002 = vmatprep.subr.mxu0 0.0
  %1003 = vmatpush2.msra.mxu0 0.0
  %1004 = vmatprep.subr.mxu0 0.0
  %1005 = vmatpush2.msra.mxu0 0.0
  %1006 = vmatprep.subr.mxu0 0.0
  %1007 = vmatpush2.msra.mxu0 0.0
  %1008 = vmatprep.subr.mxu0 0.0
  %1009 = vmatpush2.msra.mxu0 0.0
  %1010 = vmatprep.subr.mxu0 0.0
  %1011 = vmatpush2.msra.mxu0 0.0
  %1012 = vmatprep.subr.mxu0 0.0
  %1013 = vmatpush2.msra.mxu0 0.0
  %1014 = vmatprep.subr.mxu0 0.0
  %1015 = vmatpush2.msra.mxu0 0.0
  %1016 = vmatprep.subr.mxu0 0.0
  %1017 = vmatpush2.msra.mxu0 0.0
  %1018 = vmatprep.subr.mxu0 0.0
  %1019 = vmatpush2.msra.mxu0 0.0
  %1020 = vmatprep.subr.mxu0 0.0
  %1021 = vmatpush2.msra.mxu0 0.0
  %1022 = vmatprep.subr.mxu0 0.0
  %1023 = vmatpush2.msra.mxu0 0.0
  %1024 = vmatprep.subr.mxu0 0.0
  %1025 = vmatpush2.msra.mxu0 0.0
  %1026 = vmatprep.subr.mxu0 0.0
  %1027 = vmatpush2.msra.mxu0 0.0
  %1028 = vmatprep.subr.mxu0 0.0
  %1029 = vmatpush2.msra.mxu0 0.0
  %1030 = vmatprep.subr.mxu0 0.0
  %1031 = vmatpush2.msra.mxu0 0.0
  %1032 = vmatprep.mubr.f32.mxu0 0.0
  %v1033 = vand.u32 %v769, 4294901760
  %v1034 = vsub.f32 %v769, %v1033
  %1035 = vmatmul.mubr.f32.gmra.mxu0 %v1034
  %v1036 = vpop.f32.mrf.mxu0
  %v1037 = vadd.f32 %v951, %v1036
  %v1038 = vpop.f32.mrf.mxu0
  %1039 = vmatprep.mubr.f32.mxu0 0.0
  %v1040 = vand.u32 %v772, 4294901760
  %v1041 = vsub.f32 %v772, %v1040
  %1042 = vmatmul.mubr.f32.gmra.mxu0 %v1041
  %v1043 = vpop.f32.mrf.mxu0
  %v1044 = vadd.f32 %v957, %v1043
  %v1045 = vpop.f32.mrf.mxu0
  %1046 = vdwg.mxu0
  %1047 = vmatprep.subr.mxu0 0.0
  %1048 = vmatpush1.msra.mxu0 0.0
  %1049 = vmatprep.subr.mxu0 0.0
  %1050 = vmatpush1.msra.mxu0 0.0
  %1051 = vmatprep.subr.mxu0 0.0
  %1052 = vmatpush1.msra.mxu0 0.0
  %1053 = vmatprep.subr.mxu0 0.0
  %1054 = vmatpush1.msra.mxu0 0.0
  %1055 = vmatprep.subr.mxu0 0.0
  %1056 = vmatpush1.msra.mxu0 0.0
  %1057 = vmatprep.subr.mxu0 0.0
  %1058 = vmatpush1.msra.mxu0 0.0
  %1059 = vmatprep.subr.mxu0 0.0
  %1060 = vmatpush1.msra.mxu0 0.0
  %1061 = vmatprep.subr.mxu0 0.0
  %1062 = vmatpush1.msra.mxu0 0.0
  %1063 = vmatprep.subr.mxu0 0.0
  %1064 = vmatpush1.msra.mxu0 0.0
  %1065 = vmatprep.subr.mxu0 0.0
  %1066 = vmatpush1.msra.mxu0 0.0
  %1067 = vmatprep.subr.mxu0 0.0
  %1068 = vmatpush1.msra.mxu0 0.0
  %1069 = vmatprep.subr.mxu0 0.0
  %1070 = vmatpush1.msra.mxu0 0.0
  %1071 = vmatprep.subr.mxu0 0.0
  %v1072 = vand.u32 %v138, 4294901760
  %1073 = vmatpush1.msra.mxu0 %v1072
  %1074 = vmatprep.subr.mxu0 0.0
  %v1075 = vand.u32 %v137, 4294901760
  %1076 = vmatpush1.msra.mxu0 %v1075
  %1077 = vmatprep.subr.mxu0 0.0
  %v1078 = vand.u32 %v136, 4294901760
  %1079 = vmatpush1.msra.mxu0 %v1078
  %1080 = vmatprep.subr.mxu0 0.0
  %v1081 = vand.u32 %v135, 4294901760
  %1082 = vmatpush1.msra.mxu0 %v1081
  %1083 = vmatprep.subr.mxu0 0.0
  %1084 = vmatpush2.msra.mxu0 0.0
  %1085 = vmatprep.subr.mxu0 0.0
  %1086 = vmatpush2.msra.mxu0 0.0
  %1087 = vmatprep.subr.mxu0 0.0
  %1088 = vmatpush2.msra.mxu0 0.0
  %1089 = vmatprep.subr.mxu0 0.0
  %1090 = vmatpush2.msra.mxu0 0.0
  %1091 = vmatprep.subr.mxu0 0.0
  %1092 = vmatpush2.msra.mxu0 0.0
  %1093 = vmatprep.subr.mxu0 0.0
  %1094 = vmatpush2.msra.mxu0 0.0
  %1095 = vmatprep.subr.mxu0 0.0
  %1096 = vmatpush2.msra.mxu0 0.0
  %1097 = vmatprep.subr.mxu0 0.0
  %1098 = vmatpush2.msra.mxu0 0.0
  %1099 = vmatprep.subr.mxu0 0.0
  %1100 = vmatpush2.msra.mxu0 0.0
  %1101 = vmatprep.subr.mxu0 0.0
  %1102 = vmatpush2.msra.mxu0 0.0
  %1103 = vmatprep.subr.mxu0 0.0
  %1104 = vmatpush2.msra.mxu0 0.0
  %1105 = vmatprep.subr.mxu0 0.0
  %1106 = vmatpush2.msra.mxu0 0.0
  %1107 = vmatprep.subr.mxu0 0.0
  %1108 = vmatpush2.msra.mxu0 0.0
  %1109 = vmatprep.subr.mxu0 0.0
  %1110 = vmatpush2.msra.mxu0 0.0
  %1111 = vmatprep.subr.mxu0 0.0
  %1112 = vmatpush2.msra.mxu0 0.0
  %1113 = vmatprep.subr.mxu0 0.0
  %1114 = vmatpush2.msra.mxu0 0.0
  %1115 = vmatprep.mubr.f32.mxu0 0.0
  %v1116 = vand.u32 %v769, 4294901760
  %v1117 = vsub.f32 %v769, %v1116
  %v1118 = vand.u32 %v1117, 4294901760
  %1119 = vmatmul.mubr.f32.gmra.mxu0 %v1118
  %v1120 = vpop.f32.mrf.mxu0
  %v1121 = vadd.f32 %v1037, %v1120
  %v1122 = vpop.f32.mrf.mxu0
  %1123 = vmatprep.mubr.f32.mxu0 0.0
  %v1124 = vand.u32 %v772, 4294901760
  %v1125 = vsub.f32 %v772, %v1124
  %v1126 = vand.u32 %v1125, 4294901760
  %1127 = vmatmul.mubr.f32.gmra.mxu0 %v1126
  %v1128 = vpop.f32.mrf.mxu0
  %v1129 = vadd.f32 %v1044, %v1128
  %v1130 = vpop.f32.mrf.mxu0
  %1131 = vdwg.mxu0
  %1132 = vmatprep.subr.mxu0 0.0
  %1133 = vmatpush1.msra.mxu0 0.0
  %1134 = vmatprep.subr.mxu0 0.0
  %1135 = vmatpush1.msra.mxu0 0.0
  %1136 = vmatprep.subr.mxu0 0.0
  %1137 = vmatpush1.msra.mxu0 0.0
  %1138 = vmatprep.subr.mxu0 0.0
  %1139 = vmatpush1.msra.mxu0 0.0
  %1140 = vmatprep.subr.mxu0 0.0
  %1141 = vmatpush1.msra.mxu0 0.0
  %1142 = vmatprep.subr.mxu0 0.0
  %1143 = vmatpush1.msra.mxu0 0.0
  %1144 = vmatprep.subr.mxu0 0.0
  %1145 = vmatpush1.msra.mxu0 0.0
  %1146 = vmatprep.subr.mxu0 0.0
  %1147 = vmatpush1.msra.mxu0 0.0
  %1148 = vmatprep.subr.mxu0 0.0
  %1149 = vmatpush1.msra.mxu0 0.0
  %1150 = vmatprep.subr.mxu0 0.0
  %1151 = vmatpush1.msra.mxu0 0.0
  %1152 = vmatprep.subr.mxu0 0.0
  %1153 = vmatpush1.msra.mxu0 0.0
  %1154 = vmatprep.subr.mxu0 0.0
  %1155 = vmatpush1.msra.mxu0 0.0
  %1156 = vmatprep.subr.mxu0 0.0
  %v1157 = vand.u32 %v138, 4294901760
  %v1158 = vsub.f32 %v138, %v1157
  %v1159 = vand.u32 %v1158, 4294901760
  %1160 = vmatpush1.msra.mxu0 %v1159
  %1161 = vmatprep.subr.mxu0 0.0
  %v1162 = vand.u32 %v137, 4294901760
  %v1163 = vsub.f32 %v137, %v1162
  %v1164 = vand.u32 %v1163, 4294901760
  %1165 = vmatpush1.msra.mxu0 %v1164
  %1166 = vmatprep.subr.mxu0 0.0
  %v1167 = vand.u32 %v136, 4294901760
  %v1168 = vsub.f32 %v136, %v1167
  %v1169 = vand.u32 %v1168, 4294901760
  %1170 = vmatpush1.msra.mxu0 %v1169
  %1171 = vmatprep.subr.mxu0 0.0
  %v1172 = vand.u32 %v135, 4294901760
  %v1173 = vsub.f32 %v135, %v1172
  %v1174 = vand.u32 %v1173, 4294901760
  %1175 = vmatpush1.msra.mxu0 %v1174
  %1176 = vmatprep.subr.mxu0 0.0
  %1177 = vmatpush2.msra.mxu0 0.0
  %1178 = vmatprep.subr.mxu0 0.0
  %1179 = vmatpush2.msra.mxu0 0.0
  %1180 = vmatprep.subr.mxu0 0.0
  %1181 = vmatpush2.msra.mxu0 0.0
  %1182 = vmatprep.subr.mxu0 0.0
  %1183 = vmatpush2.msra.mxu0 0.0
  %1184 = vmatprep.subr.mxu0 0.0
  %1185 = vmatpush2.msra.mxu0 0.0
  %1186 = vmatprep.subr.mxu0 0.0
  %1187 = vmatpush2.msra.mxu0 0.0
  %1188 = vmatprep.subr.mxu0 0.0
  %1189 = vmatpush2.msra.mxu0 0.0
  %1190 = vmatprep.subr.mxu0 0.0
  %1191 = vmatpush2.msra.mxu0 0.0
  %1192 = vmatprep.subr.mxu0 0.0
  %1193 = vmatpush2.msra.mxu0 0.0
  %1194 = vmatprep.subr.mxu0 0.0
  %1195 = vmatpush2.msra.mxu0 0.0
  %1196 = vmatprep.subr.mxu0 0.0
  %1197 = vmatpush2.msra.mxu0 0.0
  %1198 = vmatprep.subr.mxu0 0.0
  %1199 = vmatpush2.msra.mxu0 0.0
  %1200 = vmatprep.subr.mxu0 0.0
  %1201 = vmatpush2.msra.mxu0 0.0
  %1202 = vmatprep.subr.mxu0 0.0
  %1203 = vmatpush2.msra.mxu0 0.0
  %1204 = vmatprep.subr.mxu0 0.0
  %1205 = vmatpush2.msra.mxu0 0.0
  %1206 = vmatprep.subr.mxu0 0.0
  %1207 = vmatpush2.msra.mxu0 0.0
  %1208 = vmatprep.mubr.f32.mxu0 0.0
  %v1209 = vand.u32 %v769, 4294901760
  %1210 = vmatmul.mubr.f32.gmra.mxu0 %v1209
  %v1211 = vpop.f32.mrf.mxu0
  %v1212 = vadd.f32 %v1121, %v1211
  %v1213 = vpop.f32.mrf.mxu0
  %1214 = vmatprep.mubr.f32.mxu0 0.0
  %v1215 = vand.u32 %v772, 4294901760
  %1216 = vmatmul.mubr.f32.gmra.mxu0 %v1215
  %v1217 = vpop.f32.mrf.mxu0
  %v1218 = vadd.f32 %v1129, %v1217
  %v1219 = vpop.f32.mrf.mxu0
  %1220 = vdwg.mxu0
  %1221 = vmatprep.subr.mxu0 0.0
  %1222 = vmatpush1.msra.mxu0 0.0
  %1223 = vmatprep.subr.mxu0 0.0
  %1224 = vmatpush1.msra.mxu0 0.0
  %1225 = vmatprep.subr.mxu0 0.0
  %1226 = vmatpush1.msra.mxu0 0.0
  %1227 = vmatprep.subr.mxu0 0.0
  %1228 = vmatpush1.msra.mxu0 0.0
  %1229 = vmatprep.subr.mxu0 0.0
  %1230 = vmatpush1.msra.mxu0 0.0
  %1231 = vmatprep.subr.mxu0 0.0
  %1232 = vmatpush1.msra.mxu0 0.0
  %1233 = vmatprep.subr.mxu0 0.0
  %1234 = vmatpush1.msra.mxu0 0.0
  %1235 = vmatprep.subr.mxu0 0.0
  %1236 = vmatpush1.msra.mxu0 0.0
  %1237 = vmatprep.subr.mxu0 0.0
  %1238 = vmatpush1.msra.mxu0 0.0
  %1239 = vmatprep.subr.mxu0 0.0
  %1240 = vmatpush1.msra.mxu0 0.0
  %1241 = vmatprep.subr.mxu0 0.0
  %1242 = vmatpush1.msra.mxu0 0.0
  %1243 = vmatprep.subr.mxu0 0.0
  %1244 = vmatpush1.msra.mxu0 0.0
  %1245 = vmatprep.subr.mxu0 0.0
  %v1246 = vand.u32 %v138, 4294901760
  %1247 = vmatpush1.msra.mxu0 %v1246
  %1248 = vmatprep.subr.mxu0 0.0
  %v1249 = vand.u32 %v137, 4294901760
  %1250 = vmatpush1.msra.mxu0 %v1249
  %1251 = vmatprep.subr.mxu0 0.0
  %v1252 = vand.u32 %v136, 4294901760
  %1253 = vmatpush1.msra.mxu0 %v1252
  %1254 = vmatprep.subr.mxu0 0.0
  %v1255 = vand.u32 %v135, 4294901760
  %1256 = vmatpush1.msra.mxu0 %v1255
  %1257 = vmatprep.subr.mxu0 0.0
  %1258 = vmatpush2.msra.mxu0 0.0
  %1259 = vmatprep.subr.mxu0 0.0
  %1260 = vmatpush2.msra.mxu0 0.0
  %1261 = vmatprep.subr.mxu0 0.0
  %1262 = vmatpush2.msra.mxu0 0.0
  %1263 = vmatprep.subr.mxu0 0.0
  %1264 = vmatpush2.msra.mxu0 0.0
  %1265 = vmatprep.subr.mxu0 0.0
  %1266 = vmatpush2.msra.mxu0 0.0
  %1267 = vmatprep.subr.mxu0 0.0
  %1268 = vmatpush2.msra.mxu0 0.0
  %1269 = vmatprep.subr.mxu0 0.0
  %1270 = vmatpush2.msra.mxu0 0.0
  %1271 = vmatprep.subr.mxu0 0.0
  %1272 = vmatpush2.msra.mxu0 0.0
  %1273 = vmatprep.subr.mxu0 0.0
  %1274 = vmatpush2.msra.mxu0 0.0
  %1275 = vmatprep.subr.mxu0 0.0
  %1276 = vmatpush2.msra.mxu0 0.0
  %1277 = vmatprep.subr.mxu0 0.0
  %1278 = vmatpush2.msra.mxu0 0.0
  %1279 = vmatprep.subr.mxu0 0.0
  %1280 = vmatpush2.msra.mxu0 0.0
  %1281 = vmatprep.subr.mxu0 0.0
  %1282 = vmatpush2.msra.mxu0 0.0
  %1283 = vmatprep.subr.mxu0 0.0
  %1284 = vmatpush2.msra.mxu0 0.0
  %1285 = vmatprep.subr.mxu0 0.0
  %1286 = vmatpush2.msra.mxu0 0.0
  %1287 = vmatprep.subr.mxu0 0.0
  %1288 = vmatpush2.msra.mxu0 0.0
  %1289 = vmatprep.mubr.f32.mxu0 0.0
  %v1290 = vand.u32 %v769, 4294901760
  %1291 = vmatmul.mubr.f32.gmra.mxu0 %v1290
  %v1292 = vpop.f32.mrf.mxu0
  %v1293 = vadd.f32 %v1212, %v1292
  %v1294 = vpop.f32.mrf.mxu0
  %1295 = vmatprep.mubr.f32.mxu0 0.0
  %v1296 = vand.u32 %v772, 4294901760
  %1297 = vmatmul.mubr.f32.gmra.mxu0 %v1296
  %v1298 = vpop.f32.mrf.mxu0
  %v1299 = vadd.f32 %v1218, %v1298
  %v1300 = vpop.f32.mrf.mxu0
  %1301 = vdwg.mxu0
  %v1302 = vld [vmem:[%s5] sm:$0xff]
  %v1303 = vld [vmem:[%s5 + $0x8] sm:$0xff]
  %1305 = vset.pattern.permute.xlu0 0
  %1306 = vperm.xlu0 %1305, %v1302
  %v1307 = vpop.permute.xlu0 %1306
  %1310 = vset.pattern.permute.xlu0 0
  %1311 = vperm.xlu0 %1310, %v1303
  %v1312 = vpop.permute.xlu0 %1311
  %v1314 = vadd.f32 %v1293, %v1307
  %v1315 = vadd.f32 %v1299, %v1312
  %1316 = vst.msk [vmem:[%s6] sm:$0xff] %vm47, %v1314
  %1317 = vst.msk [vmem:[%s6 + $0x8] sm:$0xff] %vm47, %v1315
  // Predicated region
  $region26: #{tpu_custom_call.1} parent=0 // pred_check
    _
  $region27: #{tpu_custom_call.1} parent=0 // pred_check_branch
    %1319 = sbr.rel (0) target = $region29
  $region28: #{tpu_custom_call.1} parent=0 // pred_region
    _
  $region29: #{tpu_custom_call.1} parent=0 // pred_fallthru
    _
  // Predicated region
  $region30: #{tpu_custom_call.1} parent=0 // pred_check
    _
  $region31: #{tpu_custom_call.1} parent=0 // pred_check_branch
    %1321 = sbr.rel (0) target = $region33
  $region32: #{tpu_custom_call.1} parent=0 // pred_region
    _
  $region33: #{tpu_custom_call.1} parent=0 // pred_fallthru
    _

</llo_original>
